<compile_context>
chip_gen: v5e
topology: v5e:2x2
jax: 0.10.0
libtpu: 0.0.40
codegen_flags: <defaults>
</compile_context>

<pallas_src>
import functools

import jax
import jax.numpy as jnp
from jax.experimental import pallas as pl
from jax.experimental.pallas import tpu as pltpu


def _round_up(x: int, m: int) -> int:
    return (x + m - 1) // m * m


def _detect_core_parallel() -> bool:
    """True on chips that expose >1 TensorCore per device (TPU v7x)."""
    try:
        kind = jax.devices()[0].device_kind.lower()
    except Exception:  # pragma: no cover - defensive only
        return False
    return ("v7" in kind) or ("tpu7" in kind) or ("7x" in kind)


def _seed_pose_encoder_kernel(x_ref, w_ref, b_ref, o_ref):
    # x_ref : (TM, F)     VMEM, pipelined per grid step
    # w_ref : (F, L_out)  VMEM, resident (grid-invariant index_map)
    # b_ref : (1, L_out)  VMEM, resident, always f32
    # o_ref : (TM, L_out) VMEM, pipelined per grid step
    acc = jnp.dot(x_ref[...], w_ref[...], preferred_element_type=jnp.float32)
    o_ref[...] = (acc + b_ref[...]).astype(o_ref.dtype)


def prepare_seed_pose_encoder_params(weight, bias, param_dtype=None):
    """One-time parameter preparation (call at load time, NOT per forward).

    weight: (latent_dim, F) float32  -- PyTorch nn.Linear layout
    bias:   (latent_dim,)   float32
    param_dtype: optional storage dtype for the transposed weight (e.g. bf16).
                 Bias stays f32 (accumulation / bias add are always f32).
    returns (w_t (F, L_out), b_row (1, L_out) f32, latent_dim)
    """
    latent_dim, feat = weight.shape
    # Lane-pad ONLY when latent_dim is large and misaligned; small or already
    # 128-aligned latent dims are written at their true width (no wrapper slice).
    if latent_dim > 128 and latent_dim % 128 != 0:
        l_out = _round_up(latent_dim, 128)
    else:
        l_out = latent_dim

    w_t = jnp.transpose(weight)                       # (F, latent_dim), done once
    if param_dtype is not None:
        w_t = w_t.astype(param_dtype)
    if l_out != latent_dim:
        w_t = jnp.zeros((feat, l_out), w_t.dtype).at[:, :latent_dim].set(w_t)

    b_row = jnp.asarray(bias, jnp.float32).reshape(1, latent_dim)
    if l_out != latent_dim:
        b_row = jnp.zeros((1, l_out), jnp.float32).at[:, :latent_dim].set(b_row)
    return w_t, b_row, latent_dim


@functools.partial(
    jax.jit, static_argnames=("latent_dim", "block_m", "core_parallel")
)
def seed_pose_encoder_apply(x, w_t, b_row, *, latent_dim, block_m=2048,
                            core_parallel=False):
    """Forward pass: returns x @ W.T + b, shape (B, latent_dim).

    x:     (B, F)       (f32 or bf16; output dtype matches x)
    w_t:   (F, L_out)   from prepare_seed_pose_encoder_params
    b_row: (1, L_out)   f32, from prepare_seed_pose_encoder_params
    """
    B, F = x.shape
    F_w, L_out = w_t.shape
    assert F_w == F, "weight feature dim does not match input"
    x_bytes = x.dtype.itemsize
    w_bytes = w_t.dtype.itemsize
    out_dtype = x.dtype
    o_bytes = jnp.dtype(out_dtype).itemsize

    # ---- batch tile selection; NO padding of B, ragged last block is masked ----
    if B <= 8:
        tm = B                                   # single block == full batch dim
    else:
        tm = max(8, (min(block_m, B) // 8) * 8)  # multiple of 8, <= B
        if core_parallel and B >= 16:
            # Guarantee >=2 grid steps so both v7x TensorCores get work.
            tm = min(tm, _round_up(pl.cdiv(B, 2), 8))

        # Honest VMEM accounting: lane-padded (round_up(...,128)) + sublane-padded
        # tiles, 2 pipeline buffers per array.  W / bias index_maps are
        # grid-invariant (Mosaic keeps one resident copy), but budget 2 buffers
        # anyway to stay safe across compiler versions.  14 MiB fits the smallest
        # default scoped-VMEM budget (v5e: 16 MiB) on every generation.
        budget = 14 * 1024 * 1024
        lane_f = _round_up(F, 128)
        lane_l = _round_up(L_out, 128)
        fixed = 2 * (_round_up(F, 8) * lane_l * w_bytes + 8 * lane_l * 4)

        def _tile_bytes(t):
            return 2 * _round_up(t, 8) * (lane_f * x_bytes + lane_l * o_bytes)

        while tm > 8 and fixed + _tile_bytes(tm) > budget:
            tm = max(8, _round_up(tm // 2, 8))

    grid = (pl.cdiv(B, tm),)
    batch_sem = pltpu.CORE_PARALLEL if core_parallel else "parallel"

    cost = pl.CostEstimate(
        flops=2 * B * F * L_out,
        transcendentals=0,
        bytes_accessed=(B * F * x_bytes + F * L_out * w_bytes
                        + L_out * 4 + B * L_out * o_bytes),
    )

    out = pl.pallas_call(
        _seed_pose_encoder_kernel,
        out_shape=jax.ShapeDtypeStruct((B, L_out), out_dtype),
        grid_spec=pltpu.PrefetchScalarGridSpec(
            num_scalar_prefetch=0,
            grid=grid,
            in_specs=[
                pl.BlockSpec((tm, F), lambda i: (i, 0)),       # x: pipelined over batch
                pl.BlockSpec((F, L_out), lambda i: (0, 0)),    # W: resident
                pl.BlockSpec((1, L_out), lambda i: (0, 0)),    # bias: resident (f32)
            ],
            out_specs=pl.BlockSpec((tm, L_out), lambda i: (i, 0)),
        ),
        compiler_params=pltpu.CompilerParams(
            dimension_semantics=(batch_sem,),
        ),
        cost_estimate=cost,
    )(x, w_t, b_row)

    if L_out != latent_dim:            # only when latent_dim > 128 and misaligned
        out = out[:, :latent_dim]
    return out


def seed_pose_encoder(x, weight, bias):
    """Convenience wrapper matching the PyTorch module's forward.

    NOTE: re-runs transpose/prep every call — for repeated use, call
    prepare_seed_pose_encoder_params once and reuse with seed_pose_encoder_apply.
    """
    w_t, b_row, latent_dim = prepare_seed_pose_encoder_params(weight, bias)
    return seed_pose_encoder_apply(x, w_t, b_row, latent_dim=latent_dim,
                                   core_parallel=_detect_core_parallel())


if __name__ == "__main__":
    # Small shapes consistent with the module: njoints=8, seed_poses=4 -> F=32
    njoints, seed_poses, latent_dim = 8, 4, 32
    F = njoints * seed_poses

    key = jax.random.PRNGKey(0)
    kx, kw, kb, kx2 = jax.random.split(key, 4)

    # Deterministic parameter init (mimics nn.Linear's uniform(-1/sqrt(F), 1/sqrt(F)))
    bound = 1.0 / jnp.sqrt(jnp.float32(F))
    weight = jax.random.uniform(kw, (latent_dim, F), jnp.float32, -bound, bound)
    bias = jax.random.uniform(kb, (latent_dim,), jnp.float32, -bound, bound)

    core_parallel = _detect_core_parallel()

    # ---- f32 path, tiny batch (single full-extent block, no padding anywhere) ----
    batch = 4
    x = jax.random.normal(kx, (batch, F), jnp.float32)
    w_t, b_row, L = prepare_seed_pose_encoder_params(weight, bias)
    out = seed_pose_encoder_apply(x, w_t, b_row, latent_dim=L,
                                  core_parallel=core_parallel)
    out = jax.block_until_ready(out)
    ref = x @ weight.T + bias
    assert out.shape == (batch, latent_dim)
    assert jnp.allclose(out, ref, atol=1e-5, rtol=1e-5)

    # ---- f32 path, batch that exercises the ragged (masked) last block ----
    batch2 = 20
    x2 = jax.random.normal(kx2, (batch2, F), jnp.float32)
    out2 = seed_pose_encoder_apply(x2, w_t, b_row, latent_dim=L,
                                   core_parallel=core_parallel)
    out2 = jax.block_until_ready(out2)
    ref2 = x2 @ weight.T + bias
    assert out2.shape == (batch2, latent_dim)
    assert jnp.allclose(out2, ref2, atol=1e-5, rtol=1e-5)

    # ---- bf16 storage path (f32 accumulation + f32 bias add, cast at store) ----
    w_t_bf, b_row_bf, L_bf = prepare_seed_pose_encoder_params(
        weight, bias, param_dtype=jnp.bfloat16)
    out_bf = seed_pose_encoder_apply(x2.astype(jnp.bfloat16), w_t_bf, b_row_bf,
                                     latent_dim=L_bf, core_parallel=core_parallel)
    out_bf = jax.block_until_ready(out_bf)
    assert out_bf.dtype == jnp.bfloat16
    assert jnp.allclose(out_bf.astype(jnp.float32), ref2, atol=5e-2, rtol=5e-2)

    print("KERNEL_OK")
</pallas_src>

<mosaic_0001>
module attributes {stable_mosaic.version = 11 : i64} {
  func.func @_seed_pose_encoder_kernel(%arg0: i32, %arg1: memref<4x32xf32, #tpu.memory_space<vmem>>, %arg2: memref<32x32xf32, #tpu.memory_space<vmem>>, %arg3: memref<1x32xf32, #tpu.memory_space<vmem>>, %arg4: memref<4x32xf32, #tpu.memory_space<vmem>>) attributes {dimension_semantics = [#tpu.dimension_semantics<parallel>], iteration_bounds = array<i64: 1>, scalar_prefetch = 0 : i64, scratch_operands = 0 : i64, tpu.core_type = #tpu.core_type<tc>, window_params = [{transform_indices = @transform_0, window_bounds = array<i64: 4, 32>}, {pipeline_mode = #tpu.pipeline_mode<synchronous>, transform_indices = @transform_1, window_bounds = array<i64: 32, 32>}, {pipeline_mode = #tpu.pipeline_mode<synchronous>, transform_indices = @transform_2, window_bounds = array<i64: 1, 32>}, {transform_indices = @transform_3, window_bounds = array<i64: 4, 32>}]} {
    %c0 = arith.constant 0 : index
    %c0_0 = arith.constant 0 : index
    %0 = vector.load %arg1[%c0, %c0_0] : memref<4x32xf32, #tpu.memory_space<vmem>>, vector<4x32xf32>
    %c0_1 = arith.constant 0 : index
    %c0_2 = arith.constant 0 : index
    %1 = vector.load %arg2[%c0_1, %c0_2] : memref<32x32xf32, #tpu.memory_space<vmem>>, vector<32x32xf32>
    %cst = arith.constant dense<0.000000e+00> : vector<4x32xf32>
    %2 = tpu.matmul %0, %1, %cst {dimension_numbers = #tpu.dot_dimension_numbers<[1], [0], [0], [1], [0, 0, 1, 1], [], []>} : vector<4x32xf32>, vector<32x32xf32>, vector<4x32xf32> -> vector<4x32xf32>
    %c0_3 = arith.constant 0 : index
    %c0_4 = arith.constant 0 : index
    %3 = vector.load %arg3[%c0_3, %c0_4] : memref<1x32xf32, #tpu.memory_space<vmem>>, vector<1x32xf32>
    %4 = vector.broadcast %3 : vector<1x32xf32> to vector<4x32xf32>
    %5 = arith.addf %2, %4 : vector<4x32xf32>
    %c0_5 = arith.constant 0 : index
    %c0_6 = arith.constant 0 : index
    %6 = vector.load %arg4[%c0_5, %c0_6] : memref<4x32xf32, #tpu.memory_space<vmem>>, vector<4x32xf32>
    tpu.vector_store %arg4[%c0_5, %c0_6], %5 {strides = array<i32>} : memref<4x32xf32, #tpu.memory_space<vmem>>, vector<4x32xf32>,
    return
  }
  func.func @transform_0(%arg0: i32) -> (i32, i32) {
    %c0_i32 = arith.constant 0 : i32
    %c0_i32_0 = arith.constant 0 : i32
    return %arg0, %c0_i32 : i32, i32
  }
  func.func @transform_1(%arg0: i32) -> (i32, i32) {
    %c0_i32 = arith.constant 0 : i32
    %c0_i32_0 = arith.constant 0 : i32
    %c0_i32_1 = arith.constant 0 : i32
    return %c0_i32, %c0_i32_0 : i32, i32
  }
  func.func @transform_2(%arg0: i32) -> (i32, i32) {
    %c0_i32 = arith.constant 0 : i32
    %c0_i32_0 = arith.constant 0 : i32
    %c0_i32_1 = arith.constant 0 : i32
    return %c0_i32, %c0_i32_0 : i32, i32
  }
  func.func @transform_3(%arg0: i32) -> (i32, i32) {
    %c0_i32 = arith.constant 0 : i32
    %c0_i32_0 = arith.constant 0 : i32
    return %arg0, %c0_i32 : i32, i32
  }
}

</mosaic_0001>

<llo_original>
// kernel: seed_pose_encoder_apply.1
$region0: #{seed_pose_encoder_apply.1}
  #allocation0 [shape = 'u32[]', space=smem, size = 0x4, offset = 0x4, fixed_abs, tag = 'smem constant byte address 0x4 - core index']
  #allocation1 [shape = 'u32[72,128]{1,0:T(1,128)}', space=vmem, size = 0x9000, scoped, tag = 'internal scratch']
  %s0 = inlined_call_operand.hbm [shape: f32[4,32], index: 0, kind: input, shape index: {}]
  %s1 = inlined_call_operand.hbm [shape: f32[32,32], index: 1, kind: input, shape index: {}]
  %s2 = inlined_call_operand.vmem [shape: f32[1,32], index: 2, kind: input, shape index: {}]
  %s3 = inlined_call_operand.hbm [shape: f32[4,32], index: 3, kind: output, shape index: {}]
  %s4 = sld [smem:[#allocation0]]
  $region30: #{seed_pose_encoder_apply.1} parent=0
    _
  %s6 = ssub.s32 1, %s4
  %s7 = scalar_select 0, %s6, %s4
  $region1: #{seed_pose_encoder_apply.1} parent=0
    #allocation2 [shape = 'u8[2048]{0}', space=vmem, size = 0x800, scoped, tag = 'input window, operand 0, single buffered']
    #allocation3 [shape = 's32[1]{0}', space=sflag, size = 0x4, scoped, tag = 'scoped memory for seed_pose_encoder_apply.1']
    #allocation4 [shape = 's32[1]{0}', space=sflag, size = 0x4, scoped, tag = 'scoped memory for seed_pose_encoder_apply.1']
    #allocation5 [shape = 'u8[16384]{0}', space=vmem, size = 0x4000, scoped, tag = 'input window, operand 1, single buffered']
    #allocation6 [shape = 's32[1]{0}', space=sflag, size = 0x4, scoped, tag = 'scoped memory for seed_pose_encoder_apply.1']
    #allocation7 [shape = 'u8[2048]{0}', space=vmem, size = 0x800, scoped, tag = 'output window, operand 0, single buffered']
    %8 = vsyncpa [#allocation3], 0
    %9 = vsyncpa [#allocation6], 0
    %10 = vsyncpa [#allocation4], 0
    // Predicated region
    $region2: #{seed_pose_encoder_apply.1} parent=1 // pred_check
      _
    $region3: #{seed_pose_encoder_apply.1} parent=1 // pred_check_branch
      %12 = sbr.rel (0) target = $region5
    $region4: #{seed_pose_encoder_apply.1} parent=1 // pred_region
      %14 = vsyncadd [#allocation3], 0
      %s16 = sshll.u32 %s0, 4
      %s17 = int_to_ptr.hbm [resolvable:$true] %s16
      %s18 = sshll.u32 [#allocation2], 4
      %s19 = int_to_ptr.vmem [resolvable:$true] %s18
      %21 = dma.hbm_to_vmem [thread:$0]  %s17, 64, %s19, [#allocation3]
    $region5: #{seed_pose_encoder_apply.1} parent=1 // pred_fallthru
      _
    // Predicated region
    $region6: #{seed_pose_encoder_apply.1} parent=1 // pred_check
      _
    $region7: #{seed_pose_encoder_apply.1} parent=1 // pred_check_branch
      %23 = sbr.rel (0) target = $region9
    $region8: #{seed_pose_encoder_apply.1} parent=1 // pred_region
      %25 = vsyncadd [#allocation6], 0
      %s26 = sshll.u32 %s1, 4
      %s27 = int_to_ptr.hbm [resolvable:$true] %s26
      %s28 = sshll.u32 [#allocation5], 4
      %s29 = int_to_ptr.vmem [resolvable:$true] %s28
      %34 = dma.hbm_to_vmem [thread:$0]  %s27, 512, %s29, [#allocation6], 128, 128, 8
    $region9: #{seed_pose_encoder_apply.1} parent=1 // pred_fallthru
      _
    // Predicated region
    $region10: #{seed_pose_encoder_apply.1} parent=1 // pred_check
      _
    $region11: #{seed_pose_encoder_apply.1} parent=1 // pred_check_branch
      %36 = sbr.rel (0) target = $region13
    $region12: #{seed_pose_encoder_apply.1} parent=1 // pred_region
      _
    $region13: #{seed_pose_encoder_apply.1} parent=1 // pred_fallthru
      _
    // Predicated region
    $region14: #{seed_pose_encoder_apply.1} parent=1 // pred_check
      _
    $region15: #{seed_pose_encoder_apply.1} parent=1 // pred_check_branch
      %38 = sbr.rel (0) target = $region17
    $region16: #{seed_pose_encoder_apply.1} parent=1 // pred_region
      %40 = dma.done [#allocation3], 64
    $region17: #{seed_pose_encoder_apply.1} parent=1 // pred_fallthru
      _
    // Predicated region
    $region18: #{seed_pose_encoder_apply.1} parent=1 // pred_check
      _
    $region19: #{seed_pose_encoder_apply.1} parent=1 // pred_check_branch
      %42 = sbr.rel (0) target = $region21
    $region20: #{seed_pose_encoder_apply.1} parent=1 // pred_region
      %44 = dma.done [#allocation6], 512
    $region21: #{seed_pose_encoder_apply.1} parent=1 // pred_fallthru
      _
    %v45 = vld [vmem:[#allocation2] sm:$0xf]
    %v46 = vld [vmem:[#allocation5] sm:$0xff]
    %v47 = vld [vmem:[#allocation5 + $0x8] sm:$0xff]
    %v48 = vld [vmem:[#allocation5 + $0x10] sm:$0xff]
    %v49 = vld [vmem:[#allocation5 + $0x18] sm:$0xff]
    %v50 = vld [vmem:[%s2] sm:$0x1]
    %v52 = vperm.slane %v50, 0
    %vm54 = vcmask 261120
    %v56 = vsel %vm54, %v45, 0
    %58 = vmatpush.msra.mxu0 0.0
    %59 = vmatpush.msra.mxu0 0.0
    %60 = vmatpush.msra.mxu0 0.0
    %61 = vmatpush.msra.mxu0 0.0
    %62 = vmatpush.msra.mxu0 0.0
    %63 = vmatpush.msra.mxu0 0.0
    %64 = vmatpush.msra.mxu0 0.0
    %65 = vmatpush.msra.mxu0 0.0
    %66 = vmatpush.msra.mxu0 0.0
    %67 = vmatpush.msra.mxu0 0.0
    %68 = vmatpush.msra.mxu0 0.0
    %69 = vmatpush.msra.mxu0 0.0
    %70 = vmatpush.msra.mxu0 %v49
    %71 = vmatpush.msra.mxu0 %v48
    %72 = vmatpush.msra.mxu0 %v47
    %73 = vmatpush.msra.mxu0 %v46
    %74 = vmatmul.f32.gmra.mxu0 %v56
    %v75 = vpop.f32.mrf.mxu0
    %v76 = vadd.f32 %v52, %v75
    %77 = vdwg.mxu0
    %vm78 = vcmask 257024
    %79 = vst.msk [vmem:[#allocation7] sm:$0xf] %vm78, %v76
    // Predicated region
    $region22: #{seed_pose_encoder_apply.1} parent=1 // pred_check
      _
    $region23: #{seed_pose_encoder_apply.1} parent=1 // pred_check_branch
      %81 = sbr.rel (0) target = $region25
    $region24: #{seed_pose_encoder_apply.1} parent=1 // pred_region
      %83 = vsyncadd [#allocation4], 0
      %s85 = sshll.u32 [#allocation7], 4
      %s86 = int_to_ptr.vmem [resolvable:$true] %s85
      %s87 = sshll.u32 %s3, 4
      %s88 = int_to_ptr.hbm [resolvable:$true] %s87
      %90 = dma.vmem_to_hbm [thread:$0]  %s86, 64, %s88, [#allocation4]
    $region25: #{seed_pose_encoder_apply.1} parent=1 // pred_fallthru
      _
    // Predicated region
    $region26: #{seed_pose_encoder_apply.1} parent=1 // pred_check
      _
    $region27: #{seed_pose_encoder_apply.1} parent=1 // pred_check_branch
      %92 = sbr.rel (0) target = $region29
    $region28: #{seed_pose_encoder_apply.1} parent=1 // pred_region
      %94 = dma.done [#allocation4], 64
    $region29: #{seed_pose_encoder_apply.1} parent=1 // pred_fallthru
      _
    %95 = vsyncpa [#allocation3], 1
    %96 = vsyncpa [#allocation6], 1
    %97 = vsyncpa [#allocation4], 1

</llo_original>
